<compile_context>
chip_gen: v5e
topology: v5e:2x2
jax: 0.10.0
libtpu: 0.0.40
codegen_flags: <defaults>
</compile_context>

<pallas_src>
import functools

import jax
import jax.numpy as jnp
from jax.experimental import pallas as pl
from jax.experimental.pallas import tpu as pltpu

EPS = 1e-5
LANE = 128


def _round_up(x, m):
    return (x + m - 1) // m * m


def _pick_row_tiling(n_rows, target):
    """Return (tile, padded_rows).

    tile is a multiple of 8 close to `target`; padded_rows is the smallest
    multiple of tile >= n_rows.  Never falls back to a whole-array block.
    """
    target = max(8, target - target % 8)
    if n_rows <= target:
        tile = _round_up(n_rows, 8)
        return tile, tile
    if n_rows % target == 0:
        return target, n_rows
    return target, _round_up(n_rows, target)


@functools.lru_cache(maxsize=None)
def _pick_vmem_limit():
    """Generation-aware scoped-VMEM limit: ~3/4 of physical, capped at 96 MiB
    (v5e/v6e: 128 MiB physical -> 96 MiB; v7x: 64 MiB -> 48 MiB)."""
    try:
        cap = getattr(pltpu.get_tpu_info(), "vmem_capacity_bytes", None)
        if cap:
            return int(min(cap * 3 // 4, 96 * 1024 * 1024))
    except Exception:
        pass
    return 48 * 1024 * 1024


# ----------------------------- kernels --------------------------------------


def _conv1x1_stats_kernel(x_ref, w_ref, h_ref, stats_ref):
    """conv1 (1x1) as a matmul on a row tile + per-tile BN partial stats.

    Pad rows of the (zero-padded) input produce zero outputs and zero stats,
    so no masking is needed here.
    """
    acc = jnp.dot(x_ref[...].astype(w_ref.dtype), w_ref[...],
                  preferred_element_type=jnp.float32)
    h_ref[...] = acc.astype(h_ref.dtype)
    stats = jnp.concatenate(
        [jnp.sum(acc, axis=0, keepdims=True),
         jnp.sum(acc * acc, axis=0, keepdims=True)], axis=0)       # (2, C)
    stats_ref[...] = stats[None]


def _make_bn_relu_conv1x1_stats_kernel(tile, r_valid):
    """fused bn (scale/bias) + relu + 1x1 conv matmul + partial stats.

    If r_valid is not None, rows at global index >= r_valid are padding (their
    input may be uninitialized) and are masked out of the partial statistics.
    """
    def kernel(h_ref, w_ref, s_ref, b_ref, o_ref, stats_ref):
        h = h_ref[...].astype(jnp.float32)
        h = jnp.maximum(h * s_ref[...] + b_ref[...], 0.0)
        acc = jnp.dot(h.astype(w_ref.dtype), w_ref[...],
                      preferred_element_type=jnp.float32)
        o_ref[...] = acc.astype(o_ref.dtype)
        if r_valid is not None:
            row = (pl.program_id(0) * tile
                   + jax.lax.broadcasted_iota(jnp.int32, (tile, 1), 0))
            acc = jnp.where(row < r_valid, acc, 0.0)
        stats = jnp.concatenate(
            [jnp.sum(acc, axis=0, keepdims=True),
             jnp.sum(acc * acc, axis=0, keepdims=True)], axis=0)
        stats_ref[...] = stats[None]

    return kernel


def _make_conv3x3_kernel(img_w, img_hw):
    """bn1+relu + 3x3 conv (stride 1, pad 1) on one image, + partial stats.

    bn1+relu is written straight into a VMEM scratch whose first/last W rows
    are zero (the H-direction halo).  The W-direction +/-1 shift is applied to
    that halo-padded LHS with pltpu.roll (XLU) + an iota column mask *before*
    the matmuls, and the three dy taps are stacked along the contraction dim,
    so conv2 is 3 matmuls with K = 3*C accumulated into a single f32 buffer —
    never touching HBM for im2col patches.
    """
    W, HW = img_w, img_hw
    HP = HW + 2 * W

    def kernel(h1_ref, w2_ref, s_ref, b_ref, h2_ref, stats_ref, hp_ref):
        cm = h1_ref.shape[1]
        c_out = w2_ref.shape[2]
        mdt = w2_ref.dtype            # MXU input dtype (f32 or bf16)

        # bn1 + relu, fused straight into the halo scratch (no concat copy).
        hp_ref[0:W, :] = jnp.zeros((W, cm), jnp.float32)
        hp_ref[W + HW:HP, :] = jnp.zeros((W, cm), jnp.float32)
        hp_ref[W:W + HW, :] = jnp.maximum(
            h1_ref[...].astype(jnp.float32) * s_ref[...] + b_ref[...], 0.0)

        hp = hp_ref[...]                                            # (HP, C)
        colq = jax.lax.broadcasted_iota(jnp.int32, (HP, 1), 0) % W
        # LHS-side +/-1 W-shift with image-edge masking (wrap rows are masked
        # or land on zero halo rows).
        hp_l = jnp.where(colq == 0, 0.0, pltpu.roll(hp, shift=1, axis=0))
        hp_r = jnp.where(colq == W - 1, 0.0,
                         pltpu.roll(hp, shift=HP - 1, axis=0))

        acc = jnp.zeros((HW, c_out), jnp.float32)
        for dx, src in enumerate((hp_l, hp, hp_r)):
            # Stack the 3 dy-shifted views along K -> one K=3*C matmul per dx.
            lhs = jnp.concatenate(
                [src[dy * W:dy * W + HW, :].astype(mdt) for dy in range(3)],
                axis=1)                                             # (HW, 3C)
            acc = acc + jnp.dot(lhs, w2_ref[dx],
                                preferred_element_type=jnp.float32)

        h2_ref[...] = acc.astype(h2_ref.dtype)
        stats = jnp.concatenate(
            [jnp.sum(acc, axis=0, keepdims=True),
             jnp.sum(acc * acc, axis=0, keepdims=True)], axis=0)
        stats_ref[...] = stats[None]

    return kernel


def _bn_residual_relu_kernel(h_ref, s_ref, b_ref, id_ref, o_ref):
    """fused bn3 (scale/bias) + residual add + relu on a row tile."""
    h = h_ref[...].astype(jnp.float32) * s_ref[...] + b_ref[...]
    o_ref[...] = jnp.maximum(h + id_ref[...].astype(jnp.float32),
                             0.0).astype(o_ref.dtype)


# ----------------------------- host wrapper ---------------------------------


def _finalize_bn(partial_stats, count, gamma, beta):
    """(T, 2, C) partial [sum; sum-sq] -> fused (scale, bias), each (1, C) f32."""
    s = jnp.sum(partial_stats, axis=0)                       # (2, C)
    mean = s[0] / count
    var = jnp.maximum(s[1] / count - mean * mean, 0.0)
    scale = gamma[0] * jax.lax.rsqrt(var + EPS)
    bias = beta[0] - mean * scale
    return scale[None], bias[None]


def bottleneck_forward(x_nchw, params, *, mxu_dtype=jnp.bfloat16,
                       row_tile_target=1024, out_dtype=None):
    """x_nchw: (N, Cin, H, W) -> (N, Cin, H, W).

    row_tile_target=1024 keeps the streaming passes (A/C/D) near the HBM
    roofline; R is zero-padded up to a tile multiple when it does not divide.
    """
    N, Cin, H, W = x_nchw.shape
    assert Cin == params["c_exp"], \
        "stride=1 / downsample=None requires in_channels == out_channels*4"
    w1, w2, w3 = params["w1"], params["w2"], params["w3"]
    cp_in, cp_mid = w1.shape
    cp_exp = w3.shape[1]
    assert cp_in == cp_exp

    HW = H * W
    assert HW % 8 == 0, "H*W must be a multiple of 8 (sublane) for the 3x3 pass"
    R = N * HW
    tile, Rp = _pick_row_tiling(R, row_tile_target)
    n_tiles = Rp // tile
    r_valid = R if Rp != R else None      # mask pad rows' BN stats only if needed

    f32 = jnp.float32
    act_dtype = mxu_dtype                 # inter-stage activation storage
    out_dtype = out_dtype if out_dtype is not None else x_nchw.dtype

    # NCHW -> NHWC -> (R, Cin) -> zero-pad rows to Rp and channels to 128 lanes.
    x2d = jnp.transpose(x_nchw, (0, 2, 3, 1)).reshape(R, Cin)
    x2d = jnp.pad(x2d, ((0, Rp - R), (0, cp_in - Cin))).astype(act_dtype)

    w1m = w1.astype(mxu_dtype)
    w2m = w2.astype(mxu_dtype)            # (3, 3*cp_mid, cp_mid), dy stacked on K
    w3m = w3.astype(mxu_dtype)

    cparams = pltpu.CompilerParams(dimension_semantics=("parallel",),
                                   vmem_limit_bytes=_pick_vmem_limit())

    # ---- pass A: conv1 (1x1) + bn1 partial stats -----------------------------
    h1, st1 = pl.pallas_call(
        _conv1x1_stats_kernel,
        grid=(n_tiles,),
        in_specs=[pl.BlockSpec((tile, cp_in), lambda i: (i, 0)),
                  pl.BlockSpec((cp_in, cp_mid), lambda i: (0, 0))],
        out_specs=(pl.BlockSpec((tile, cp_mid), lambda i: (i, 0)),
                   pl.BlockSpec((1, 2, cp_mid), lambda i: (i, 0, 0))),
        out_shape=(jax.ShapeDtypeStruct((Rp, cp_mid), act_dtype),
                   jax.ShapeDtypeStruct((n_tiles, 2, cp_mid), f32)),
        compiler_params=cparams,
    )(x2d, w1m)
    s1, b1 = _finalize_bn(st1, R, params["g1"], params["b1"])

    # ---- pass B: bn1+relu + conv2 (3x3, per-image halo) + bn2 partial stats --
    h2, st2 = pl.pallas_call(
        _make_conv3x3_kernel(W, HW),
        grid=(N,),
        in_specs=[pl.BlockSpec((HW, cp_mid), lambda n: (n, 0)),
                  pl.BlockSpec((3, 3 * cp_mid, cp_mid), lambda n: (0, 0, 0)),
                  pl.BlockSpec((1, cp_mid), lambda n: (0, 0)),
                  pl.BlockSpec((1, cp_mid), lambda n: (0, 0))],
        out_specs=(pl.BlockSpec((HW, cp_mid), lambda n: (n, 0)),
                   pl.BlockSpec((1, 2, cp_mid), lambda n: (n, 0, 0))),
        out_shape=(jax.ShapeDtypeStruct((Rp, cp_mid), act_dtype),
                   jax.ShapeDtypeStruct((N, 2, cp_mid), f32)),
        scratch_shapes=[pltpu.VMEM((HW + 2 * W, cp_mid), jnp.float32)],
        compiler_params=cparams,
    )(h1, w2m, s1, b1)
    s2, b2 = _finalize_bn(st2, R, params["g2"], params["b2"])

    # ---- pass C: bn2+relu + conv3 (1x1) + bn3 partial stats (pad-masked) -----
    h3, st3 = pl.pallas_call(
        _make_bn_relu_conv1x1_stats_kernel(tile, r_valid),
        grid=(n_tiles,),
        in_specs=[pl.BlockSpec((tile, cp_mid), lambda i: (i, 0)),
                  pl.BlockSpec((cp_mid, cp_exp), lambda i: (0, 0)),
                  pl.BlockSpec((1, cp_mid), lambda i: (0, 0)),
                  pl.BlockSpec((1, cp_mid), lambda i: (0, 0))],
        out_specs=(pl.BlockSpec((tile, cp_exp), lambda i: (i, 0)),
                   pl.BlockSpec((1, 2, cp_exp), lambda i: (i, 0, 0))),
        out_shape=(jax.ShapeDtypeStruct((Rp, cp_exp), act_dtype),
                   jax.ShapeDtypeStruct((n_tiles, 2, cp_exp), f32)),
        compiler_params=cparams,
    )(h2, w3m, s2, b2)
    s3, b3 = _finalize_bn(st3, R, params["g3"], params["b3"])

    # ---- pass D: bn3 + residual add + relu -----------------------------------
    out2d = pl.pallas_call(
        _bn_residual_relu_kernel,
        grid=(n_tiles,),
        in_specs=[pl.BlockSpec((tile, cp_exp), lambda i: (i, 0)),
                  pl.BlockSpec((1, cp_exp), lambda i: (0, 0)),
                  pl.BlockSpec((1, cp_exp), lambda i: (0, 0)),
                  pl.BlockSpec((tile, cp_exp), lambda i: (i, 0))],
        out_specs=pl.BlockSpec((tile, cp_exp), lambda i: (i, 0)),
        out_shape=jax.ShapeDtypeStruct((Rp, cp_exp), out_dtype),
        compiler_params=cparams,
    )(h3, s3, b3, x2d)

    out = out2d[:R, :Cin].reshape(N, H, W, Cin)
    return jnp.transpose(out, (0, 3, 1, 2))


# ----------------------------- params / reference ---------------------------


def make_params(in_channels, out_channels, key):
    """Synthetic parameters (PyTorch layouts), pre-packed & lane-padded.

    conv2 weights are packed as (3 dx, 3*cp_mid, cp_mid): for each dx, the
    three dy taps are stacked along the contraction dim (matches the kernel's
    dy-stacked LHS).
    """
    expansion = 4
    c_mid = out_channels
    c_exp = out_channels * expansion
    cp_in = _round_up(in_channels, LANE)
    cp_mid = _round_up(c_mid, LANE)
    cp_exp = _round_up(c_exp, LANE)
    k1, k2, k3 = jax.random.split(key, 3)
    # PyTorch conv weight layouts (OIHW)
    w1_t = jax.random.normal(k1, (c_mid, in_channels, 1, 1), jnp.float32) * 0.1
    w2_t = jax.random.normal(k2, (c_mid, c_mid, 3, 3), jnp.float32) * 0.1
    w3_t = jax.random.normal(k3, (c_exp, c_mid, 1, 1), jnp.float32) * 0.1

    w1 = jnp.zeros((cp_in, cp_mid), jnp.float32).at[
        :in_channels, :c_mid].set(jnp.transpose(w1_t[:, :, 0, 0]))
    dx_blocks = []
    for dx in range(3):
        rows = []
        for dy in range(3):
            t = jnp.zeros((cp_mid, cp_mid), jnp.float32).at[
                :c_mid, :c_mid].set(jnp.transpose(w2_t[:, :, dy, dx]))
            rows.append(t)
        dx_blocks.append(jnp.concatenate(rows, axis=0))        # (3*cpm, cpm)
    w2 = jnp.stack(dx_blocks, axis=0)                          # (3, 3*cpm, cpm)
    w3 = jnp.zeros((cp_mid, cp_exp), jnp.float32).at[
        :c_mid, :c_exp].set(jnp.transpose(w3_t[:, :, 0, 0]))

    params = {
        "w1": w1, "w2": w2, "w3": w3,
        "g1": jnp.zeros((1, cp_mid), jnp.float32).at[0, :c_mid].set(1.0),
        "b1": jnp.zeros((1, cp_mid), jnp.float32),
        "g2": jnp.zeros((1, cp_mid), jnp.float32).at[0, :c_mid].set(1.0),
        "b2": jnp.zeros((1, cp_mid), jnp.float32),
        "g3": jnp.zeros((1, cp_exp), jnp.float32).at[0, :c_exp].set(1.0),
        "b3": jnp.zeros((1, cp_exp), jnp.float32),
        "c_in": in_channels, "c_mid": c_mid, "c_exp": c_exp,
    }
    return params, (w1_t, w2_t, w3_t)


def reference_forward(x, w1_t, w2_t, w3_t):
    """Pure-JAX NCHW reference (training-mode BN, gamma=1, beta=0)."""
    def bn(h):
        m = h.mean(axis=(0, 2, 3), keepdims=True)
        v = jnp.square(h - m).mean(axis=(0, 2, 3), keepdims=True)
        return (h - m) / jnp.sqrt(v + EPS)

    def conv(h, w, pad):
        return jax.lax.conv_general_dilated(
            h, w, window_strides=(1, 1), padding=[(pad, pad), (pad, pad)],
            dimension_numbers=("NCHW", "OIHW", "NCHW"))

    identity = x
    h = jax.nn.relu(bn(conv(x, w1_t, 0)))
    h = jax.nn.relu(bn(conv(h, w2_t, 1)))
    h = bn(conv(h, w3_t, 0))
    return jax.nn.relu(h + identity)


if __name__ == "__main__":
    in_channels = 16      # must equal out_channels * expansion (residual add)
    out_channels = 4
    N, H, W = 2, 16, 16

    key = jax.random.PRNGKey(0)
    k_x, k_w = jax.random.split(key)
    x = jax.random.normal(k_x, (N, in_channels, H, W), jnp.float32)
    params, (w1_t, w2_t, w3_t) = make_params(in_channels, out_channels, k_w)

    ref = jax.block_until_ready(reference_forward(x, w1_t, w2_t, w3_t))

    # exact-arithmetic path (f32 MXU inputs), default row tiling: tight check
    out_f32 = jax.block_until_ready(
        bottleneck_forward(x, params, mxu_dtype=jnp.float32))
    assert out_f32.shape == ref.shape == (N, in_channels, H, W)
    assert jnp.allclose(out_f32, ref, atol=2e-3, rtol=2e-3), "f32 path mismatch"

    # exact path with a row tile that forces R-padding + masked BN stats
    # (R=512 rows, tile=192 -> Rp=576, 3 grid steps): tight check
    out_pad = jax.block_until_ready(
        bottleneck_forward(x, params, mxu_dtype=jnp.float32,
                           row_tile_target=192))
    assert jnp.allclose(out_pad, ref, atol=2e-3, rtol=2e-3), "padded path mismatch"

    # fast path (bf16 MXU inputs, bf16 activations + bf16 residual read): loose
    out_bf16 = jax.block_until_ready(
        bottleneck_forward(x, params, mxu_dtype=jnp.bfloat16))
    assert out_bf16.shape == ref.shape
    assert jnp.allclose(out_bf16, ref, atol=1e-1, rtol=1e-1), "bf16 path mismatch"

    print("KERNEL_OK")
</pallas_src>

<mosaic_0001>
module attributes {stable_mosaic.version = 11 : i64} {
  func.func @_conv1x1_stats_kernel(%arg0: i32, %arg1: memref<512x128xf32, #tpu.memory_space<vmem>>, %arg2: memref<128x128xf32, #tpu.memory_space<vmem>>, %arg3: memref<512x128xf32, #tpu.memory_space<vmem>>, %arg4: memref<1x2x128xf32, #tpu.memory_space<vmem>>) attributes {dimension_semantics = [#tpu.dimension_semantics<parallel>], iteration_bounds = array<i64: 1>, scalar_prefetch = 0 : i64, scratch_operands = 0 : i64, tpu.core_type = #tpu.core_type<tc>, window_params = [{transform_indices = @transform_0, window_bounds = array<i64: 512, 128>}, {pipeline_mode = #tpu.pipeline_mode<synchronous>, transform_indices = @transform_1, window_bounds = array<i64: 128, 128>}, {transform_indices = @transform_2, window_bounds = array<i64: 512, 128>}, {transform_indices = @transform_3, window_bounds = array<i64: 1, 2, 128>}]} {
    %c0 = arith.constant 0 : index
    %c0_0 = arith.constant 0 : index
    %0 = vector.load %arg1[%c0, %c0_0] : memref<512x128xf32, #tpu.memory_space<vmem>>, vector<512x128xf32>
    %c0_1 = arith.constant 0 : index
    %c0_2 = arith.constant 0 : index
    %1 = vector.load %arg2[%c0_1, %c0_2] : memref<128x128xf32, #tpu.memory_space<vmem>>, vector<128x128xf32>
    %cst = arith.constant dense<0.000000e+00> : vector<512x128xf32>
    %2 = tpu.matmul %0, %1, %cst {dimension_numbers = #tpu.dot_dimension_numbers<[1], [0], [0], [1], [0, 0, 1, 1], [], []>} : vector<512x128xf32>, vector<128x128xf32>, vector<512x128xf32> -> vector<512x128xf32>
    %c0_3 = arith.constant 0 : index
    %c0_4 = arith.constant 0 : index
    %3 = vector.load %arg3[%c0_3, %c0_4] : memref<512x128xf32, #tpu.memory_space<vmem>>, vector<512x128xf32>
    tpu.vector_store %arg3[%c0_3, %c0_4], %2 {strides = array<i32>} : memref<512x128xf32, #tpu.memory_space<vmem>>, vector<512x128xf32>,
    %cst_5 = arith.constant dense<0.000000e+00> : vector<128xf32>
    %4 = vector.multi_reduction <add>, %2, %cst_5 [0] : vector<512x128xf32> to vector<128xf32>
    %5 = vector.shape_cast %4 : vector<128xf32> to vector<1x128xf32>
    %6 = arith.mulf %2, %2 : vector<512x128xf32>
    %cst_6 = arith.constant dense<0.000000e+00> : vector<128xf32>
    %7 = vector.multi_reduction <add>, %6, %cst_6 [0] : vector<512x128xf32> to vector<128xf32>
    %8 = vector.shape_cast %7 : vector<128xf32> to vector<1x128xf32>
    %9 = tpu.concatenate %5, %8 in 0 : vector<1x128xf32>, vector<1x128xf32> -> vector<2x128xf32>
    %10 = vector.shape_cast %9 : vector<2x128xf32> to vector<1x2x128xf32>
    %c0_7 = arith.constant 0 : index
    %c0_8 = arith.constant 0 : index
    %c0_9 = arith.constant 0 : index
    %11 = vector.load %arg4[%c0_7, %c0_8, %c0_9] : memref<1x2x128xf32, #tpu.memory_space<vmem>>, vector<1x2x128xf32>
    tpu.vector_store %arg4[%c0_7, %c0_8, %c0_9], %10 {strides = array<i32>} : memref<1x2x128xf32, #tpu.memory_space<vmem>>, vector<1x2x128xf32>,
    return
  }
  func.func @transform_0(%arg0: i32) -> (i32, i32) {
    %c0_i32 = arith.constant 0 : i32
    %c0_i32_0 = arith.constant 0 : i32
    return %arg0, %c0_i32 : i32, i32
  }
  func.func @transform_1(%arg0: i32) -> (i32, i32) {
    %c0_i32 = arith.constant 0 : i32
    %c0_i32_0 = arith.constant 0 : i32
    %c0_i32_1 = arith.constant 0 : i32
    return %c0_i32, %c0_i32_0 : i32, i32
  }
  func.func @transform_2(%arg0: i32) -> (i32, i32) {
    %c0_i32 = arith.constant 0 : i32
    %c0_i32_0 = arith.constant 0 : i32
    return %arg0, %c0_i32 : i32, i32
  }
  func.func @transform_3(%arg0: i32) -> (i32, i32, i32) {
    %c0_i32 = arith.constant 0 : i32
    %c0_i32_0 = arith.constant 0 : i32
    %c0_i32_1 = arith.constant 0 : i32
    return %arg0, %c0_i32, %c0_i32_0 : i32, i32, i32
  }
}

</mosaic_0001>

<llo_original>
// kernel: tpu_custom_call.1
$region0: #{tpu_custom_call.1}
  #allocation0 [shape = 'u32[]', space=smem, size = 0x4, offset = 0x4, fixed_abs, tag = 'smem constant byte address 0x4 - core index']
  #allocation1 [shape = 'u32[72,128]{1,0:T(1,128)}', space=vmem, size = 0x9000, scoped, tag = 'internal scratch']
  %s0 = inlined_call_operand.hbm [shape: f32[512,128], index: 0, kind: input, shape index: {}]
  %s1 = inlined_call_operand.hbm [shape: f32[128,128], index: 1, kind: input, shape index: {}]
  %s2 = inlined_call_operand.hbm [shape: f32[512,128], index: 2, kind: output, shape index: {0}]
  %s3 = inlined_call_operand.hbm [shape: f32[1,2,128], index: 3, kind: output, shape index: {1}]
  %4 = xla_tuple %s2, %s3
  %s5 = sld [smem:[#allocation0]]
  $region34: #{tpu_custom_call.1} parent=0
    _
  %s7 = ssub.s32 1, %s5
  %s8 = scalar_select 0, %s7, %s5
  $region1: #{tpu_custom_call.1} parent=0
    #allocation2 [shape = 'u8[262144]{0}', space=vmem, size = 0x40000, scoped, tag = 'input window, operand 0, single buffered']
    #allocation3 [shape = 's32[1]{0}', space=sflag, size = 0x4, scoped, tag = 'scoped memory for tpu_custom_call.1']
    #allocation4 [shape = 's32[1]{0}', space=sflag, size = 0x4, scoped, tag = 'scoped memory for tpu_custom_call.1']
    #allocation5 [shape = 'u8[65536]{0}', space=vmem, size = 0x10000, scoped, tag = 'input window, operand 1, single buffered']
    #allocation6 [shape = 's32[1]{0}', space=sflag, size = 0x4, scoped, tag = 'scoped memory for tpu_custom_call.1']
    #allocation7 [shape = 'u8[262144]{0}', space=vmem, size = 0x40000, scoped, tag = 'output window, operand 0, single buffered']
    #allocation8 [shape = 'u8[1024]{0}', space=vmem, size = 0x400, scoped, tag = 'output window, operand 1, single buffered']
    #allocation9 [shape = 's32[1]{0}', space=sflag, size = 0x4, scoped, tag = 'scoped memory for tpu_custom_call.1']
    %9 = vsyncpa [#allocation3], 0
    %10 = vsyncpa [#allocation6], 0
    %11 = vsyncpa [#allocation4], 0
    %12 = vsyncpa [#allocation9], 0
    // Predicated region
    $region2: #{tpu_custom_call.1} parent=1 // pred_check
      _
    $region3: #{tpu_custom_call.1} parent=1 // pred_check_branch
      %14 = sbr.rel (0) target = $region5
    $region4: #{tpu_custom_call.1} parent=1 // pred_region
      %16 = vsyncadd [#allocation3], 0
      %s17 = sshll.u32 %s0, 4
      %s18 = int_to_ptr.hbm [resolvable:$true] %s17
      %s19 = sshll.u32 [#allocation2], 4
      %s20 = int_to_ptr.vmem [resolvable:$true] %s19
      %25 = dma.hbm_to_vmem [thread:$0]  %s18, 8192, %s20, [#allocation3], 128, 128, 8
    $region5: #{tpu_custom_call.1} parent=1 // pred_fallthru
      _
    // Predicated region
    $region6: #{tpu_custom_call.1} parent=1 // pred_check
      _
    $region7: #{tpu_custom_call.1} parent=1 // pred_check_branch
      %27 = sbr.rel (0) target = $region9
    $region8: #{tpu_custom_call.1} parent=1 // pred_region
      %29 = vsyncadd [#allocation6], 0
      %s30 = sshll.u32 %s1, 4
      %s31 = int_to_ptr.hbm [resolvable:$true] %s30
      %s32 = sshll.u32 [#allocation5], 4
      %s33 = int_to_ptr.vmem [resolvable:$true] %s32
      %38 = dma.hbm_to_vmem [thread:$0]  %s31, 2048, %s33, [#allocation6], 128, 128, 8
    $region9: #{tpu_custom_call.1} parent=1 // pred_fallthru
      _
    // Predicated region
    $region10: #{tpu_custom_call.1} parent=1 // pred_check
      _
    $region11: #{tpu_custom_call.1} parent=1 // pred_check_branch
      %40 = sbr.rel (0) target = $region13
    $region12: #{tpu_custom_call.1} parent=1 // pred_region
      %42 = dma.done [#allocation3], 8192
    $region13: #{tpu_custom_call.1} parent=1 // pred_fallthru
      _
    // Predicated region
    $region14: #{tpu_custom_call.1} parent=1 // pred_check
      _
    $region15: #{tpu_custom_call.1} parent=1 // pred_check_branch
      %44 = sbr.rel (0) target = $region17
    $region16: #{tpu_custom_call.1} parent=1 // pred_region
      %46 = dma.done [#allocation6], 2048
    $region17: #{tpu_custom_call.1} parent=1 // pred_fallthru
      _
    %v47 = vld [vmem:[#allocation2] sm:$0xff]
    %v48 = vld [vmem:[#allocation2 + $0x8] sm:$0xff]
    %v49 = vld [vmem:[#allocation2 + $0x10] sm:$0xff]
    %v50 = vld [vmem:[#allocation2 + $0x18] sm:$0xff]
    %v51 = vld [vmem:[#allocation2 + $0x20] sm:$0xff]
    %v52 = vld [vmem:[#allocation2 + $0x28] sm:$0xff]
    %v53 = vld [vmem:[#allocation2 + $0x30] sm:$0xff]
    %v54 = vld [vmem:[#allocation2 + $0x38] sm:$0xff]
    %v55 = vld [vmem:[#allocation2 + $0x40] sm:$0xff]
    %v56 = vld [vmem:[#allocation2 + $0x48] sm:$0xff]
    %v57 = vld [vmem:[#allocation2 + $0x50] sm:$0xff]
    %v58 = vld [vmem:[#allocation2 + $0x58] sm:$0xff]
    %v59 = vld [vmem:[#allocation2 + $0x60] sm:$0xff]
    %v60 = vld [vmem:[#allocation2 + $0x68] sm:$0xff]
    %v61 = vld [vmem:[#allocation2 + $0x70] sm:$0xff]
    %v62 = vld [vmem:[#allocation2 + $0x78] sm:$0xff]
    %v63 = vld [vmem:[#allocation2 + $0x80] sm:$0xff]
    %v64 = vld [vmem:[#allocation2 + $0x88] sm:$0xff]
    %v65 = vld [vmem:[#allocation2 + $0x90] sm:$0xff]
    %v66 = vld [vmem:[#allocation2 + $0x98] sm:$0xff]
    %v67 = vld [vmem:[#allocation2 + $0xa0] sm:$0xff]
    %v68 = vld [vmem:[#allocation2 + $0xa8] sm:$0xff]
    %v69 = vld [vmem:[#allocation2 + $0xb0] sm:$0xff]
    %v70 = vld [vmem:[#allocation2 + $0xb8] sm:$0xff]
    %v71 = vld [vmem:[#allocation2 + $0xc0] sm:$0xff]
    %v72 = vld [vmem:[#allocation2 + $0xc8] sm:$0xff]
    %v73 = vld [vmem:[#allocation2 + $0xd0] sm:$0xff]
    %v74 = vld [vmem:[#allocation2 + $0xd8] sm:$0xff]
    %v75 = vld [vmem:[#allocation2 + $0xe0] sm:$0xff]
    %v76 = vld [vmem:[#allocation2 + $0xe8] sm:$0xff]
    %v77 = vld [vmem:[#allocation2 + $0xf0] sm:$0xff]
    %v78 = vld [vmem:[#allocation2 + $0xf8] sm:$0xff]
    %v79 = vld [vmem:[#allocation2 + $0x100] sm:$0xff]
    %v80 = vld [vmem:[#allocation2 + $0x108] sm:$0xff]
    %v81 = vld [vmem:[#allocation2 + $0x110] sm:$0xff]
    %v82 = vld [vmem:[#allocation2 + $0x118] sm:$0xff]
    %v83 = vld [vmem:[#allocation2 + $0x120] sm:$0xff]
    %v84 = vld [vmem:[#allocation2 + $0x128] sm:$0xff]
    %v85 = vld [vmem:[#allocation2 + $0x130] sm:$0xff]
    %v86 = vld [vmem:[#allocation2 + $0x138] sm:$0xff]
    %v87 = vld [vmem:[#allocation2 + $0x140] sm:$0xff]
    %v88 = vld [vmem:[#allocation2 + $0x148] sm:$0xff]
    %v89 = vld [vmem:[#allocation2 + $0x150] sm:$0xff]
    %v90 = vld [vmem:[#allocation2 + $0x158] sm:$0xff]
    %v91 = vld [vmem:[#allocation2 + $0x160] sm:$0xff]
    %v92 = vld [vmem:[#allocation2 + $0x168] sm:$0xff]
    %v93 = vld [vmem:[#allocation2 + $0x170] sm:$0xff]
    %v94 = vld [vmem:[#allocation2 + $0x178] sm:$0xff]
    %v95 = vld [vmem:[#allocation2 + $0x180] sm:$0xff]
    %v96 = vld [vmem:[#allocation2 + $0x188] sm:$0xff]
    %v97 = vld [vmem:[#allocation2 + $0x190] sm:$0xff]
    %v98 = vld [vmem:[#allocation2 + $0x198] sm:$0xff]
    %v99 = vld [vmem:[#allocation2 + $0x1a0] sm:$0xff]
    %v100 = vld [vmem:[#allocation2 + $0x1a8] sm:$0xff]
    %v101 = vld [vmem:[#allocation2 + $0x1b0] sm:$0xff]
    %v102 = vld [vmem:[#allocation2 + $0x1b8] sm:$0xff]
    %v103 = vld [vmem:[#allocation2 + $0x1c0] sm:$0xff]
    %v104 = vld [vmem:[#allocation2 + $0x1c8] sm:$0xff]
    %v105 = vld [vmem:[#allocation2 + $0x1d0] sm:$0xff]
    %v106 = vld [vmem:[#allocation2 + $0x1d8] sm:$0xff]
    %v107 = vld [vmem:[#allocation2 + $0x1e0] sm:$0xff]
    %v108 = vld [vmem:[#allocation2 + $0x1e8] sm:$0xff]
    %v109 = vld [vmem:[#allocation2 + $0x1f0] sm:$0xff]
    %v110 = vld [vmem:[#allocation2 + $0x1f8] sm:$0xff]
    %v111 = vld [vmem:[#allocation5] sm:$0xff]
    %v112 = vld [vmem:[#allocation5 + $0x8] sm:$0xff]
    %v113 = vld [vmem:[#allocation5 + $0x10] sm:$0xff]
    %v114 = vld [vmem:[#allocation5 + $0x18] sm:$0xff]
    %v115 = vld [vmem:[#allocation5 + $0x20] sm:$0xff]
    %v116 = vld [vmem:[#allocation5 + $0x28] sm:$0xff]
    %v117 = vld [vmem:[#allocation5 + $0x30] sm:$0xff]
    %v118 = vld [vmem:[#allocation5 + $0x38] sm:$0xff]
    %v119 = vld [vmem:[#allocation5 + $0x40] sm:$0xff]
    %v120 = vld [vmem:[#allocation5 + $0x48] sm:$0xff]
    %v121 = vld [vmem:[#allocation5 + $0x50] sm:$0xff]
    %v122 = vld [vmem:[#allocation5 + $0x58] sm:$0xff]
    %v123 = vld [vmem:[#allocation5 + $0x60] sm:$0xff]
    %v124 = vld [vmem:[#allocation5 + $0x68] sm:$0xff]
    %v125 = vld [vmem:[#allocation5 + $0x70] sm:$0xff]
    %v126 = vld [vmem:[#allocation5 + $0x78] sm:$0xff]
    %127 = vmatpush.msra.mxu0 %v126
    %128 = vmatpush.msra.mxu0 %v125
    %129 = vmatpush.msra.mxu0 %v124
    %130 = vmatpush.msra.mxu0 %v123
    %131 = vmatpush.msra.mxu0 %v122
    %132 = vmatpush.msra.mxu0 %v121
    %133 = vmatpush.msra.mxu0 %v120
    %134 = vmatpush.msra.mxu0 %v119
    %135 = vmatpush.msra.mxu0 %v118
    %136 = vmatpush.msra.mxu0 %v117
    %137 = vmatpush.msra.mxu0 %v116
    %138 = vmatpush.msra.mxu0 %v115
    %139 = vmatpush.msra.mxu0 %v114
    %140 = vmatpush.msra.mxu0 %v113
    %141 = vmatpush.msra.mxu0 %v112
    %142 = vmatpush.msra.mxu0 %v111
    %143 = vmatmul.f32.gmra.mxu0 %v47
    %v144 = vpop.f32.mrf.mxu0
    %v145 = vadd.f32 0.0, %v144
    %146 = vmatmul.f32.gmra.mxu0 %v48
    %v147 = vpop.f32.mrf.mxu0
    %v148 = vadd.f32 0.0, %v147
    %149 = vmatmul.f32.gmra.mxu0 %v49
    %v150 = vpop.f32.mrf.mxu0
    %v151 = vadd.f32 0.0, %v150
    %152 = vmatmul.f32.gmra.mxu0 %v50
    %v153 = vpop.f32.mrf.mxu0
    %v154 = vadd.f32 0.0, %v153
    %155 = vmatmul.f32.gmra.mxu0 %v51
    %v156 = vpop.f32.mrf.mxu0
    %v157 = vadd.f32 0.0, %v156
    %158 = vmatmul.f32.gmra.mxu0 %v52
    %v159 = vpop.f32.mrf.mxu0
    %v160 = vadd.f32 0.0, %v159
    %161 = vmatmul.f32.gmra.mxu0 %v53
    %v162 = vpop.f32.mrf.mxu0
    %v163 = vadd.f32 0.0, %v162
    %164 = vmatmul.f32.gmra.mxu0 %v54
    %v165 = vpop.f32.mrf.mxu0
    %v166 = vadd.f32 0.0, %v165
    %167 = vmatmul.f32.gmra.mxu0 %v55
    %v168 = vpop.f32.mrf.mxu0
    %v169 = vadd.f32 0.0, %v168
    %170 = vmatmul.f32.gmra.mxu0 %v56
    %v171 = vpop.f32.mrf.mxu0
    %v172 = vadd.f32 0.0, %v171
    %173 = vmatmul.f32.gmra.mxu0 %v57
    %v174 = vpop.f32.mrf.mxu0
    %v175 = vadd.f32 0.0, %v174
    %176 = vmatmul.f32.gmra.mxu0 %v58
    %v177 = vpop.f32.mrf.mxu0
    %v178 = vadd.f32 0.0, %v177
    %179 = vmatmul.f32.gmra.mxu0 %v59
    %v180 = vpop.f32.mrf.mxu0
    %v181 = vadd.f32 0.0, %v180
    %182 = vmatmul.f32.gmra.mxu0 %v60
    %v183 = vpop.f32.mrf.mxu0
    %v184 = vadd.f32 0.0, %v183
    %185 = vmatmul.f32.gmra.mxu0 %v61
    %v186 = vpop.f32.mrf.mxu0
    %v187 = vadd.f32 0.0, %v186
    %188 = vmatmul.f32.gmra.mxu0 %v62
    %v189 = vpop.f32.mrf.mxu0
    %v190 = vadd.f32 0.0, %v189
    %191 = vmatmul.f32.gmra.mxu0 %v63
    %v192 = vpop.f32.mrf.mxu0
    %v193 = vadd.f32 0.0, %v192
    %194 = vmatmul.f32.gmra.mxu0 %v64
    %v195 = vpop.f32.mrf.mxu0
    %v196 = vadd.f32 0.0, %v195
    %197 = vmatmul.f32.gmra.mxu0 %v65
    %v198 = vpop.f32.mrf.mxu0
    %v199 = vadd.f32 0.0, %v198
    %200 = vmatmul.f32.gmra.mxu0 %v66
    %v201 = vpop.f32.mrf.mxu0
    %v202 = vadd.f32 0.0, %v201
    %203 = vmatmul.f32.gmra.mxu0 %v67
    %v204 = vpop.f32.mrf.mxu0
    %v205 = vadd.f32 0.0, %v204
    %206 = vmatmul.f32.gmra.mxu0 %v68
    %v207 = vpop.f32.mrf.mxu0
    %v208 = vadd.f32 0.0, %v207
    %209 = vmatmul.f32.gmra.mxu0 %v69
    %v210 = vpop.f32.mrf.mxu0
    %v211 = vadd.f32 0.0, %v210
    %212 = vmatmul.f32.gmra.mxu0 %v70
    %v213 = vpop.f32.mrf.mxu0
    %v214 = vadd.f32 0.0, %v213
    %215 = vmatmul.f32.gmra.mxu0 %v71
    %v216 = vpop.f32.mrf.mxu0
    %v217 = vadd.f32 0.0, %v216
    %218 = vmatmul.f32.gmra.mxu0 %v72
    %v219 = vpop.f32.mrf.mxu0
    %v220 = vadd.f32 0.0, %v219
    %221 = vmatmul.f32.gmra.mxu0 %v73
    %v222 = vpop.f32.mrf.mxu0
    %v223 = vadd.f32 0.0, %v222
    %224 = vmatmul.f32.gmra.mxu0 %v74
    %v225 = vpop.f32.mrf.mxu0
    %v226 = vadd.f32 0.0, %v225
    %227 = vmatmul.f32.gmra.mxu0 %v75
    %v228 = vpop.f32.mrf.mxu0
    %v229 = vadd.f32 0.0, %v228
    %230 = vmatmul.f32.gmra.mxu0 %v76
    %v231 = vpop.f32.mrf.mxu0
    %v232 = vadd.f32 0.0, %v231
    %233 = vmatmul.f32.gmra.mxu0 %v77
    %v234 = vpop.f32.mrf.mxu0
    %v235 = vadd.f32 0.0, %v234
    %236 = vmatmul.f32.gmra.mxu0 %v78
    %v237 = vpop.f32.mrf.mxu0
    %v238 = vadd.f32 0.0, %v237
    %239 = vmatmul.f32.gmra.mxu0 %v79
    %v240 = vpop.f32.mrf.mxu0
    %v241 = vadd.f32 0.0, %v240
    %242 = vmatmul.f32.gmra.mxu0 %v80
    %v243 = vpop.f32.mrf.mxu0
    %v244 = vadd.f32 0.0, %v243
    %245 = vmatmul.f32.gmra.mxu0 %v81
    %v246 = vpop.f32.mrf.mxu0
    %v247 = vadd.f32 0.0, %v246
    %248 = vmatmul.f32.gmra.mxu0 %v82
    %v249 = vpop.f32.mrf.mxu0
    %v250 = vadd.f32 0.0, %v249
    %251 = vmatmul.f32.gmra.mxu0 %v83
    %v252 = vpop.f32.mrf.mxu0
    %v253 = vadd.f32 0.0, %v252
    %254 = vmatmul.f32.gmra.mxu0 %v84
    %v255 = vpop.f32.mrf.mxu0
    %v256 = vadd.f32 0.0, %v255
    %257 = vmatmul.f32.gmra.mxu0 %v85
    %v258 = vpop.f32.mrf.mxu0
    %v259 = vadd.f32 0.0, %v258
    %260 = vmatmul.f32.gmra.mxu0 %v86
    %v261 = vpop.f32.mrf.mxu0
    %v262 = vadd.f32 0.0, %v261
    %263 = vmatmul.f32.gmra.mxu0 %v87
    %v264 = vpop.f32.mrf.mxu0
    %v265 = vadd.f32 0.0, %v264
    %266 = vmatmul.f32.gmra.mxu0 %v88
    %v267 = vpop.f32.mrf.mxu0
    %v268 = vadd.f32 0.0, %v267
    %269 = vmatmul.f32.gmra.mxu0 %v89
    %v270 = vpop.f32.mrf.mxu0
    %v271 = vadd.f32 0.0, %v270
    %272 = vmatmul.f32.gmra.mxu0 %v90
    %v273 = vpop.f32.mrf.mxu0
    %v274 = vadd.f32 0.0, %v273
    %275 = vmatmul.f32.gmra.mxu0 %v91
    %v276 = vpop.f32.mrf.mxu0
    %v277 = vadd.f32 0.0, %v276
    %278 = vmatmul.f32.gmra.mxu0 %v92
    %v279 = vpop.f32.mrf.mxu0
    %v280 = vadd.f32 0.0, %v279
    %281 = vmatmul.f32.gmra.mxu0 %v93
    %v282 = vpop.f32.mrf.mxu0
    %v283 = vadd.f32 0.0, %v282
    %284 = vmatmul.f32.gmra.mxu0 %v94
    %v285 = vpop.f32.mrf.mxu0
    %v286 = vadd.f32 0.0, %v285
    %287 = vmatmul.f32.gmra.mxu0 %v95
    %v288 = vpop.f32.mrf.mxu0
    %v289 = vadd.f32 0.0, %v288
    %290 = vmatmul.f32.gmra.mxu0 %v96
    %v291 = vpop.f32.mrf.mxu0
    %v292 = vadd.f32 0.0, %v291
    %293 = vmatmul.f32.gmra.mxu0 %v97
    %v294 = vpop.f32.mrf.mxu0
    %v295 = vadd.f32 0.0, %v294
    %296 = vmatmul.f32.gmra.mxu0 %v98
    %v297 = vpop.f32.mrf.mxu0
    %v298 = vadd.f32 0.0, %v297
    %299 = vmatmul.f32.gmra.mxu0 %v99
    %v300 = vpop.f32.mrf.mxu0
    %v301 = vadd.f32 0.0, %v300
    %302 = vmatmul.f32.gmra.mxu0 %v100
    %v303 = vpop.f32.mrf.mxu0
    %v304 = vadd.f32 0.0, %v303
    %305 = vmatmul.f32.gmra.mxu0 %v101
    %v306 = vpop.f32.mrf.mxu0
    %v307 = vadd.f32 0.0, %v306
    %308 = vmatmul.f32.gmra.mxu0 %v102
    %v309 = vpop.f32.mrf.mxu0
    %v310 = vadd.f32 0.0, %v309
    %311 = vmatmul.f32.gmra.mxu0 %v103
    %v312 = vpop.f32.mrf.mxu0
    %v313 = vadd.f32 0.0, %v312
    %314 = vmatmul.f32.gmra.mxu0 %v104
    %v315 = vpop.f32.mrf.mxu0
    %v316 = vadd.f32 0.0, %v315
    %317 = vmatmul.f32.gmra.mxu0 %v105
    %v318 = vpop.f32.mrf.mxu0
    %v319 = vadd.f32 0.0, %v318
    %320 = vmatmul.f32.gmra.mxu0 %v106
    %v321 = vpop.f32.mrf.mxu0
    %v322 = vadd.f32 0.0, %v321
    %323 = vmatmul.f32.gmra.mxu0 %v107
    %v324 = vpop.f32.mrf.mxu0
    %v325 = vadd.f32 0.0, %v324
    %326 = vmatmul.f32.gmra.mxu0 %v108
    %v327 = vpop.f32.mrf.mxu0
    %v328 = vadd.f32 0.0, %v327
    %329 = vmatmul.f32.gmra.mxu0 %v109
    %v330 = vpop.f32.mrf.mxu0
    %v331 = vadd.f32 0.0, %v330
    %332 = vmatmul.f32.gmra.mxu0 %v110
    %v333 = vpop.f32.mrf.mxu0
    %v334 = vadd.f32 0.0, %v333
    %335 = vdwg.mxu0
    %336 = vst [vmem:[#allocation7] sm:$0xff] %v145
    %337 = vst [vmem:[#allocation7 + $0x8] sm:$0xff] %v148
    %338 = vst [vmem:[#allocation7 + $0x10] sm:$0xff] %v151
    %339 = vst [vmem:[#allocation7 + $0x18] sm:$0xff] %v154
    %340 = vst [vmem:[#allocation7 + $0x20] sm:$0xff] %v157
    %341 = vst [vmem:[#allocation7 + $0x28] sm:$0xff] %v160
    %342 = vst [vmem:[#allocation7 + $0x30] sm:$0xff] %v163
    %343 = vst [vmem:[#allocation7 + $0x38] sm:$0xff] %v166
    %344 = vst [vmem:[#allocation7 + $0x40] sm:$0xff] %v169
    %345 = vst [vmem:[#allocation7 + $0x48] sm:$0xff] %v172
    %346 = vst [vmem:[#allocation7 + $0x50] sm:$0xff] %v175
    %347 = vst [vmem:[#allocation7 + $0x58] sm:$0xff] %v178
    %348 = vst [vmem:[#allocation7 + $0x60] sm:$0xff] %v181
    %349 = vst [vmem:[#allocation7 + $0x68] sm:$0xff] %v184
    %350 = vst [vmem:[#allocation7 + $0x70] sm:$0xff] %v187
    %351 = vst [vmem:[#allocation7 + $0x78] sm:$0xff] %v190
    %352 = vst [vmem:[#allocation7 + $0x80] sm:$0xff] %v193
    %353 = vst [vmem:[#allocation7 + $0x88] sm:$0xff] %v196
    %354 = vst [vmem:[#allocation7 + $0x90] sm:$0xff] %v199
    %355 = vst [vmem:[#allocation7 + $0x98] sm:$0xff] %v202
    %356 = vst [vmem:[#allocation7 + $0xa0] sm:$0xff] %v205
    %357 = vst [vmem:[#allocation7 + $0xa8] sm:$0xff] %v208
    %358 = vst [vmem:[#allocation7 + $0xb0] sm:$0xff] %v211
    %359 = vst [vmem:[#allocation7 + $0xb8] sm:$0xff] %v214
    %360 = vst [vmem:[#allocation7 + $0xc0] sm:$0xff] %v217
    %361 = vst [vmem:[#allocation7 + $0xc8] sm:$0xff] %v220
    %362 = vst [vmem:[#allocation7 + $0xd0] sm:$0xff] %v223
    %363 = vst [vmem:[#allocation7 + $0xd8] sm:$0xff] %v226
    %364 = vst [vmem:[#allocation7 + $0xe0] sm:$0xff] %v229
    %365 = vst [vmem:[#allocation7 + $0xe8] sm:$0xff] %v232
    %366 = vst [vmem:[#allocation7 + $0xf0] sm:$0xff] %v235
    %367 = vst [vmem:[#allocation7 + $0xf8] sm:$0xff] %v238
    %368 = vst [vmem:[#allocation7 + $0x100] sm:$0xff] %v241
    %369 = vst [vmem:[#allocation7 + $0x108] sm:$0xff] %v244
    %370 = vst [vmem:[#allocation7 + $0x110] sm:$0xff] %v247
    %371 = vst [vmem:[#allocation7 + $0x118] sm:$0xff] %v250
    %372 = vst [vmem:[#allocation7 + $0x120] sm:$0xff] %v253
    %373 = vst [vmem:[#allocation7 + $0x128] sm:$0xff] %v256
    %374 = vst [vmem:[#allocation7 + $0x130] sm:$0xff] %v259
    %375 = vst [vmem:[#allocation7 + $0x138] sm:$0xff] %v262
    %376 = vst [vmem:[#allocation7 + $0x140] sm:$0xff] %v265
    %377 = vst [vmem:[#allocation7 + $0x148] sm:$0xff] %v268
    %378 = vst [vmem:[#allocation7 + $0x150] sm:$0xff] %v271
    %379 = vst [vmem:[#allocation7 + $0x158] sm:$0xff] %v274
    %380 = vst [vmem:[#allocation7 + $0x160] sm:$0xff] %v277
    %381 = vst [vmem:[#allocation7 + $0x168] sm:$0xff] %v280
    %382 = vst [vmem:[#allocation7 + $0x170] sm:$0xff] %v283
    %383 = vst [vmem:[#allocation7 + $0x178] sm:$0xff] %v286
    %384 = vst [vmem:[#allocation7 + $0x180] sm:$0xff] %v289
    %385 = vst [vmem:[#allocation7 + $0x188] sm:$0xff] %v292
    %386 = vst [vmem:[#allocation7 + $0x190] sm:$0xff] %v295
    %387 = vst [vmem:[#allocation7 + $0x198] sm:$0xff] %v298
    %388 = vst [vmem:[#allocation7 + $0x1a0] sm:$0xff] %v301
    %389 = vst [vmem:[#allocation7 + $0x1a8] sm:$0xff] %v304
    %390 = vst [vmem:[#allocation7 + $0x1b0] sm:$0xff] %v307
    %391 = vst [vmem:[#allocation7 + $0x1b8] sm:$0xff] %v310
    %392 = vst [vmem:[#allocation7 + $0x1c0] sm:$0xff] %v313
    %393 = vst [vmem:[#allocation7 + $0x1c8] sm:$0xff] %v316
    %394 = vst [vmem:[#allocation7 + $0x1d0] sm:$0xff] %v319
    %395 = vst [vmem:[#allocation7 + $0x1d8] sm:$0xff] %v322
    %396 = vst [vmem:[#allocation7 + $0x1e0] sm:$0xff] %v325
    %397 = vst [vmem:[#allocation7 + $0x1e8] sm:$0xff] %v328
    %398 = vst [vmem:[#allocation7 + $0x1f0] sm:$0xff] %v331
    %399 = vst [vmem:[#allocation7 + $0x1f8] sm:$0xff] %v334
    %v400 = vadd.f32 %v145, %v148
    %v401 = vadd.f32 %v400, %v151
    %v402 = vadd.f32 %v401, %v154
    %v403 = vadd.f32 %v402, %v157
    %v404 = vadd.f32 %v403, %v160
    %v405 = vadd.f32 %v404, %v163
    %v406 = vadd.f32 %v405, %v166
    %v407 = vadd.f32 %v406, %v169
    %v408 = vadd.f32 %v407, %v172
    %v409 = vadd.f32 %v408, %v175
    %v410 = vadd.f32 %v409, %v178
    %v411 = vadd.f32 %v410, %v181
    %v412 = vadd.f32 %v411, %v184
    %v413 = vadd.f32 %v412, %v187
    %v414 = vadd.f32 %v413, %v190
    %v415 = vadd.f32 %v414, %v193
    %v416 = vadd.f32 %v415, %v196
    %v417 = vadd.f32 %v416, %v199
    %v418 = vadd.f32 %v417, %v202
    %v419 = vadd.f32 %v418, %v205
    %v420 = vadd.f32 %v419, %v208
    %v421 = vadd.f32 %v420, %v211
    %v422 = vadd.f32 %v421, %v214
    %v423 = vadd.f32 %v422, %v217
    %v424 = vadd.f32 %v423, %v220
    %v425 = vadd.f32 %v424, %v223
    %v426 = vadd.f32 %v425, %v226
    %v427 = vadd.f32 %v426, %v229
    %v428 = vadd.f32 %v427, %v232
    %v429 = vadd.f32 %v428, %v235
    %v430 = vadd.f32 %v429, %v238
    %v431 = vadd.f32 %v430, %v241
    %v432 = vadd.f32 %v431, %v244
    %v433 = vadd.f32 %v432, %v247
    %v434 = vadd.f32 %v433, %v250
    %v435 = vadd.f32 %v434, %v253
    %v436 = vadd.f32 %v435, %v256
    %v437 = vadd.f32 %v436, %v259
    %v438 = vadd.f32 %v437, %v262
    %v439 = vadd.f32 %v438, %v265
    %v440 = vadd.f32 %v439, %v268
    %v441 = vadd.f32 %v440, %v271
    %v442 = vadd.f32 %v441, %v274
    %v443 = vadd.f32 %v442, %v277
    %v444 = vadd.f32 %v443, %v280
    %v445 = vadd.f32 %v444, %v283
    %v446 = vadd.f32 %v445, %v286
    %v447 = vadd.f32 %v446, %v289
    %v448 = vadd.f32 %v447, %v292
    %v449 = vadd.f32 %v448, %v295
    %v450 = vadd.f32 %v449, %v298
    %v451 = vadd.f32 %v450, %v301
    %v452 = vadd.f32 %v451, %v304
    %v453 = vadd.f32 %v452, %v307
    %v454 = vadd.f32 %v453, %v310
    %v455 = vadd.f32 %v454, %v313
    %v456 = vadd.f32 %v455, %v316
    %v457 = vadd.f32 %v456, %v319
    %v458 = vadd.f32 %v457, %v322
    %v459 = vadd.f32 %v458, %v325
    %v460 = vadd.f32 %v459, %v328
    %v461 = vadd.f32 %v460, %v331
    %v462 = vadd.f32 %v461, %v334
    %v463 = vrot.slane %v462, 4
    %v464 = vadd.f32 %v462, %v463
    %v465 = vrot.slane %v464, 2
    %v466 = vadd.f32 %v464, %v465
    %v467 = vrot.slane %v466, 1
    %v468 = vadd.f32 %v466, %v467
    %v469 = vmul.f32 %v145, %v145
    %v470 = vmul.f32 %v148, %v148
    %v471 = vmul.f32 %v151, %v151
    %v472 = vmul.f32 %v154, %v154
    %v473 = vmul.f32 %v157, %v157
    %v474 = vmul.f32 %v160, %v160
    %v475 = vmul.f32 %v163, %v163
    %v476 = vmul.f32 %v166, %v166
    %v477 = vmul.f32 %v169, %v169
    %v478 = vmul.f32 %v172, %v172
    %v479 = vmul.f32 %v175, %v175
    %v480 = vmul.f32 %v178, %v178
    %v481 = vmul.f32 %v181, %v181
    %v482 = vmul.f32 %v184, %v184
    %v483 = vmul.f32 %v187, %v187
    %v484 = vmul.f32 %v190, %v190
    %v485 = vmul.f32 %v193, %v193
    %v486 = vmul.f32 %v196, %v196
    %v487 = vmul.f32 %v199, %v199
    %v488 = vmul.f32 %v202, %v202
    %v489 = vmul.f32 %v205, %v205
    %v490 = vmul.f32 %v208, %v208
    %v491 = vmul.f32 %v211, %v211
    %v492 = vmul.f32 %v214, %v214
    %v493 = vmul.f32 %v217, %v217
    %v494 = vmul.f32 %v220, %v220
    %v495 = vmul.f32 %v223, %v223
    %v496 = vmul.f32 %v226, %v226
    %v497 = vmul.f32 %v229, %v229
    %v498 = vmul.f32 %v232, %v232
    %v499 = vmul.f32 %v235, %v235
    %v500 = vmul.f32 %v238, %v238
    %v501 = vmul.f32 %v241, %v241
    %v502 = vmul.f32 %v244, %v244
    %v503 = vmul.f32 %v247, %v247
    %v504 = vmul.f32 %v250, %v250
    %v505 = vmul.f32 %v253, %v253
    %v506 = vmul.f32 %v256, %v256
    %v507 = vmul.f32 %v259, %v259
    %v508 = vmul.f32 %v262, %v262
    %v509 = vmul.f32 %v265, %v265
    %v510 = vmul.f32 %v268, %v268
    %v511 = vmul.f32 %v271, %v271
    %v512 = vmul.f32 %v274, %v274
    %v513 = vmul.f32 %v277, %v277
    %v514 = vmul.f32 %v280, %v280
    %v515 = vmul.f32 %v283, %v283
    %v516 = vmul.f32 %v286, %v286
    %v517 = vmul.f32 %v289, %v289
    %v518 = vmul.f32 %v292, %v292
    %v519 = vmul.f32 %v295, %v295
    %v520 = vmul.f32 %v298, %v298
    %v521 = vmul.f32 %v301, %v301
    %v522 = vmul.f32 %v304, %v304
    %v523 = vmul.f32 %v307, %v307
    %v524 = vmul.f32 %v310, %v310
    %v525 = vmul.f32 %v313, %v313
    %v526 = vmul.f32 %v316, %v316
    %v527 = vmul.f32 %v319, %v319
    %v528 = vmul.f32 %v322, %v322
    %v529 = vmul.f32 %v325, %v325
    %v530 = vmul.f32 %v328, %v328
    %v531 = vmul.f32 %v331, %v331
    %v532 = vmul.f32 %v334, %v334
    %v533 = vadd.f32 %v469, %v470
    %v534 = vadd.f32 %v533, %v471
    %v535 = vadd.f32 %v534, %v472
    %v536 = vadd.f32 %v535, %v473
    %v537 = vadd.f32 %v536, %v474
    %v538 = vadd.f32 %v537, %v475
    %v539 = vadd.f32 %v538, %v476
    %v540 = vadd.f32 %v539, %v477
    %v541 = vadd.f32 %v540, %v478
    %v542 = vadd.f32 %v541, %v479
    %v543 = vadd.f32 %v542, %v480
    %v544 = vadd.f32 %v543, %v481
    %v545 = vadd.f32 %v544, %v482
    %v546 = vadd.f32 %v545, %v483
    %v547 = vadd.f32 %v546, %v484
    %v548 = vadd.f32 %v547, %v485
    %v549 = vadd.f32 %v548, %v486
    %v550 = vadd.f32 %v549, %v487
    %v551 = vadd.f32 %v550, %v488
    %v552 = vadd.f32 %v551, %v489
    %v553 = vadd.f32 %v552, %v490
    %v554 = vadd.f32 %v553, %v491
    %v555 = vadd.f32 %v554, %v492
    %v556 = vadd.f32 %v555, %v493
    %v557 = vadd.f32 %v556, %v494
    %v558 = vadd.f32 %v557, %v495
    %v559 = vadd.f32 %v558, %v496
    %v560 = vadd.f32 %v559, %v497
    %v561 = vadd.f32 %v560, %v498
    %v562 = vadd.f32 %v561, %v499
    %v563 = vadd.f32 %v562, %v500
    %v564 = vadd.f32 %v563, %v501
    %v565 = vadd.f32 %v564, %v502
    %v566 = vadd.f32 %v565, %v503
    %v567 = vadd.f32 %v566, %v504
    %v568 = vadd.f32 %v567, %v505
    %v569 = vadd.f32 %v568, %v506
    %v570 = vadd.f32 %v569, %v507
    %v571 = vadd.f32 %v570, %v508
    %v572 = vadd.f32 %v571, %v509
    %v573 = vadd.f32 %v572, %v510
    %v574 = vadd.f32 %v573, %v511
    %v575 = vadd.f32 %v574, %v512
    %v576 = vadd.f32 %v575, %v513
    %v577 = vadd.f32 %v576, %v514
    %v578 = vadd.f32 %v577, %v515
    %v579 = vadd.f32 %v578, %v516
    %v580 = vadd.f32 %v579, %v517
    %v581 = vadd.f32 %v580, %v518
    %v582 = vadd.f32 %v581, %v519
    %v583 = vadd.f32 %v582, %v520
    %v584 = vadd.f32 %v583, %v521
    %v585 = vadd.f32 %v584, %v522
    %v586 = vadd.f32 %v585, %v523
    %v587 = vadd.f32 %v586, %v524
    %v588 = vadd.f32 %v587, %v525
    %v589 = vadd.f32 %v588, %v526
    %v590 = vadd.f32 %v589, %v527
    %v591 = vadd.f32 %v590, %v528
    %v592 = vadd.f32 %v591, %v529
    %v593 = vadd.f32 %v592, %v530
    %v594 = vadd.f32 %v593, %v531
    %v595 = vadd.f32 %v594, %v532
    %v596 = vrot.slane %v595, 4
    %v597 = vadd.f32 %v595, %v596
    %v598 = vrot.slane %v597, 2
    %v599 = vadd.f32 %v597, %v598
    %v600 = vrot.slane %v599, 1
    %v601 = vadd.f32 %v599, %v600
    %vm602 = vcmask 1040384
    %v603 = vsel %vm602, %v468, %v601
    %604 = vst [vmem:[#allocation8] sm:$0x3] %v603
    // Predicated region
    $region18: #{tpu_custom_call.1} parent=1 // pred_check
      _
    $region19: #{tpu_custom_call.1} parent=1 // pred_check_branch
      %606 = sbr.rel (0) target = $region21
    $region20: #{tpu_custom_call.1} parent=1 // pred_region
      %608 = vsyncadd [#allocation4], 0
      %s609 = sshll.u32 [#allocation7], 4
      %s610 = int_to_ptr.vmem [resolvable:$true] %s609
      %s611 = sshll.u32 %s2, 4
      %s612 = int_to_ptr.hbm [resolvable:$true] %s611
      %617 = dma.vmem_to_hbm [thread:$0]  %s610, 8192, %s612, [#allocation4], 128, 128, 8
    $region21: #{tpu_custom_call.1} parent=1 // pred_fallthru
      _
    // Predicated region
    $region22: #{tpu_custom_call.1} parent=1 // pred_check
      _
    $region23: #{tpu_custom_call.1} parent=1 // pred_check_branch
      %619 = sbr.rel (0) target = $region25
    $region24: #{tpu_custom_call.1} parent=1 // pred_region
      %621 = vsyncadd [#allocation9], 0
      %s623 = sshll.u32 [#allocation8], 4
      %s624 = int_to_ptr.vmem [resolvable:$true] %s623
      %s625 = sshll.u32 %s3, 4
      %s626 = int_to_ptr.hbm [resolvable:$true] %s625
      %628 = dma.vmem_to_hbm [thread:$0]  %s624, 32, %s626, [#allocation9]
    $region25: #{tpu_custom_call.1} parent=1 // pred_fallthru
      _
    // Predicated region
    $region26: #{tpu_custom_call.1} parent=1 // pred_check
      _
    $region27: #{tpu_custom_call.1} parent=1 // pred_check_branch
      %630 = sbr.rel (0) target = $region29
    $region28: #{tpu_custom_call.1} parent=1 // pred_region
      %632 = dma.done [#allocation4], 8192
    $region29: #{tpu_custom_call.1} parent=1 // pred_fallthru
      _
    // Predicated region
    $region30: #{tpu_custom_call.1} parent=1 // pred_check
      _
    $region31: #{tpu_custom_call.1} parent=1 // pred_check_branch
      %634 = sbr.rel (0) target = $region33
    $region32: #{tpu_custom_call.1} parent=1 // pred_region
      %636 = dma.done [#allocation9], 32
    $region33: #{tpu_custom_call.1} parent=1 // pred_fallthru
      _
    %637 = vsyncpa [#allocation3], 1
    %638 = vsyncpa [#allocation6], 1
    %639 = vsyncpa [#allocation4], 1
    %640 = vsyncpa [#allocation9], 1

</llo_original>
